<compile_context>
chip_gen: v5e
topology: v5e:2x2
jax: 0.10.0
libtpu: 0.0.40
codegen_flags: <defaults>
</compile_context>

<pallas_src>
import jax
import jax.numpy as jnp
from jax.experimental import pallas as pl
from jax.experimental.pallas import tpu as pltpu


def _round_up(x, m):
    return ((x + m - 1) // m) * m


def _make_policy_kernel(apply_rescale):
    """Kernel factory: the rescale epilogue is specialized in/out at trace time."""
    if apply_rescale:
        def kernel(x_ref, w1_ref, b1_ref, w2_ref, b2_ref, wm_ref, bm_ref,
                   scale_ref, bias_ref, out_ref):
            x = x_ref[...]
            h = jnp.dot(x, w1_ref[...], preferred_element_type=jnp.float32) + b1_ref[...]
            h = jnp.maximum(h, 0.0)
            h = jnp.dot(h, w2_ref[...], preferred_element_type=jnp.float32) + b2_ref[...]
            h = jnp.maximum(h, 0.0)
            m = jnp.dot(h, wm_ref[...], preferred_element_type=jnp.float32) + bm_ref[...]
            out_ref[...] = jnp.tanh(m) * scale_ref[...] + bias_ref[...]
    else:
        def kernel(x_ref, w1_ref, b1_ref, w2_ref, b2_ref, wm_ref, bm_ref, out_ref):
            x = x_ref[...]
            h = jnp.dot(x, w1_ref[...], preferred_element_type=jnp.float32) + b1_ref[...]
            h = jnp.maximum(h, 0.0)
            h = jnp.dot(h, w2_ref[...], preferred_element_type=jnp.float32) + b2_ref[...]
            h = jnp.maximum(h, 0.0)
            m = jnp.dot(h, wm_ref[...], preferred_element_type=jnp.float32) + bm_ref[...]
            out_ref[...] = jnp.tanh(m)
    return kernel


def deterministic_policy_forward(state, params, *, apply_rescale=False, batch_tile=512):
    """Fused MLP forward. state: [B, num_inputs] float32. Returns [B, num_actions]."""
    w1, b1, w2, b2, wm, bm, scale, bias = params
    B, num_inputs = state.shape
    H = w1.shape[1]
    A = wm.shape[1]

    # ---- lane-dense padding of the feature widths (zero-padding is exact) ----
    H_pad = max(_round_up(H, 128), 128)
    A_pad = max(_round_up(A, 128), 128)

    w1p = jnp.zeros((num_inputs, H_pad), jnp.float32).at[:, :H].set(w1)
    b1p = jnp.zeros((1, H_pad), jnp.float32).at[:, :H].set(b1)
    w2p = jnp.zeros((H_pad, H_pad), jnp.float32).at[:H, :H].set(w2)
    b2p = jnp.zeros((1, H_pad), jnp.float32).at[:, :H].set(b2)
    wmp = jnp.zeros((H_pad, A_pad), jnp.float32).at[:H, :A].set(wm)
    bmp = jnp.zeros((1, A_pad), jnp.float32).at[:, :A].set(bm)

    # ---- batch tiling: sublane-aligned tile, grid over the batch ----
    TB = min(batch_tile, _round_up(B, 8))
    B_pad = _round_up(B, TB)
    if B_pad != B:
        state_p = jnp.zeros((B_pad, num_inputs), state.dtype).at[:B, :].set(state)
    else:
        state_p = state
    grid = (B_pad // TB,)

    const = lambda i: (0, 0)                      # resident operands: DMA'd once
    in_specs = [
        pl.BlockSpec((TB, num_inputs), lambda i: (i, 0)),   # streamed per tile
        pl.BlockSpec((num_inputs, H_pad), const),
        pl.BlockSpec((1, H_pad), const),
        pl.BlockSpec((H_pad, H_pad), const),
        pl.BlockSpec((1, H_pad), const),
        pl.BlockSpec((H_pad, A_pad), const),
        pl.BlockSpec((1, A_pad), const),
    ]
    inputs = [state_p, w1p, b1p, w2p, b2p, wmp, bmp]
    if apply_rescale:
        scalep = jnp.ones((1, A_pad), jnp.float32).at[:, :A].set(scale)
        biasp = jnp.zeros((1, A_pad), jnp.float32).at[:, :A].set(bias)
        in_specs += [pl.BlockSpec((1, A_pad), const), pl.BlockSpec((1, A_pad), const)]
        inputs += [scalep, biasp]

    out_spec = pl.BlockSpec((TB, A_pad), lambda i: (i, 0))   # lane-dense store

    # ---- advisory cost estimate for the XLA scheduler ----
    flops = 2 * B_pad * (num_inputs * H_pad + H_pad * H_pad + H_pad * A_pad)
    bytes_accessed = 4 * (B_pad * num_inputs + num_inputs * H_pad + H_pad * H_pad
                          + H_pad * A_pad + 2 * H_pad + 3 * A_pad + B_pad * A_pad)
    cost = pl.CostEstimate(flops=flops, transcendentals=B_pad * A_pad,
                           bytes_accessed=bytes_accessed)

    # ---- VMEM budget: 2x streamed tiles + resident weights + activation temps.
    # Capped at 32 MiB so the limit is valid on v7x (64 MiB physical VMEM).
    vmem_est = (2 * (TB * num_inputs + TB * A_pad) * 4
                + 2 * (num_inputs * H_pad + H_pad * H_pad + H_pad * A_pad
                       + 2 * H_pad + 3 * A_pad) * 4
                + 4 * TB * H_pad * 4)
    vmem_limit = int(min(max(2 * vmem_est, 16 * 1024 * 1024), 32 * 1024 * 1024))

    kernel = _make_policy_kernel(apply_rescale)
    out = pl.pallas_call(
        kernel,
        out_shape=jax.ShapeDtypeStruct((B_pad, A_pad), jnp.float32),
        grid=grid,
        in_specs=in_specs,
        out_specs=out_spec,
        compiler_params=pltpu.CompilerParams(
            dimension_semantics=("parallel",),     # megacore sharding on v7x
            vmem_limit_bytes=vmem_limit),
        cost_estimate=cost,
    )(*inputs)
    return out[:B, :A]


def xavier_uniform(key, fan_in, fan_out):
    # torch.nn.init.xavier_uniform_ with gain=1
    bound = jnp.sqrt(6.0 / (fan_in + fan_out))
    return jax.random.uniform(key, (fan_in, fan_out), jnp.float32,
                              minval=-bound, maxval=bound)


def init_params(key, num_inputs, num_actions, hidden_dim):
    k1, k2, k3 = jax.random.split(key, 3)
    w1 = xavier_uniform(k1, num_inputs, hidden_dim)
    b1 = jnp.zeros((1, hidden_dim), jnp.float32)      # constant_(bias, 0)
    w2 = xavier_uniform(k2, hidden_dim, hidden_dim)
    b2 = jnp.zeros((1, hidden_dim), jnp.float32)
    wm = xavier_uniform(k3, hidden_dim, num_actions)
    bm = jnp.zeros((1, num_actions), jnp.float32)
    # action_space is None -> scale 1.0, bias 0.0 (rescale specialized away)
    scale = jnp.ones((1, num_actions), jnp.float32)
    bias = jnp.zeros((1, num_actions), jnp.float32)
    return (w1, b1, w2, b2, wm, bm, scale, bias)


if __name__ == "__main__":
    batch = 2
    num_inputs = 16
    num_actions = 4
    hidden_dim = 32

    key = jax.random.PRNGKey(0)
    k_state, k_params = jax.random.split(key)

    state = jax.random.normal(k_state, (batch, num_inputs), jnp.float32)
    params = init_params(k_params, num_inputs, num_actions, hidden_dim)

    # action_space is None -> no rescale epilogue needed (specialized out).
    mean = deterministic_policy_forward(state, params, apply_rescale=False)
    jax.block_until_ready(mean)

    # reference check in plain JAX (includes the trivial scale/bias for parity)
    w1, b1, w2, b2, wm, bm, scale, bias = params
    h = jnp.maximum(state @ w1 + b1, 0.0)
    h = jnp.maximum(h @ w2 + b2, 0.0)
    ref = jnp.tanh(h @ wm + bm) * scale + bias
    assert mean.shape == (batch, num_actions)
    assert jnp.allclose(mean, ref, atol=1e-5, rtol=1e-5)

    # also exercise the general (rescale) path once
    mean2 = deterministic_policy_forward(state, params, apply_rescale=True)
    jax.block_until_ready(mean2)
    assert jnp.allclose(mean2, ref, atol=1e-5, rtol=1e-5)

    print("KERNEL_OK")
</pallas_src>

<mosaic_0001>
module attributes {stable_mosaic.version = 11 : i64} {
  func.func @kernel(%arg0: i32, %arg1: memref<8x16xf32, #tpu.memory_space<vmem>>, %arg2: memref<16x128xf32, #tpu.memory_space<vmem>>, %arg3: memref<1x128xf32, #tpu.memory_space<vmem>>, %arg4: memref<128x128xf32, #tpu.memory_space<vmem>>, %arg5: memref<1x128xf32, #tpu.memory_space<vmem>>, %arg6: memref<128x128xf32, #tpu.memory_space<vmem>>, %arg7: memref<1x128xf32, #tpu.memory_space<vmem>>, %arg8: memref<8x128xf32, #tpu.memory_space<vmem>>) attributes {dimension_semantics = [#tpu.dimension_semantics<parallel>], iteration_bounds = array<i64: 1>, scalar_prefetch = 0 : i64, scratch_operands = 0 : i64, tpu.core_type = #tpu.core_type<tc>, window_params = [{transform_indices = @transform_0, window_bounds = array<i64: 8, 16>}, {pipeline_mode = #tpu.pipeline_mode<synchronous>, transform_indices = @transform_1, window_bounds = array<i64: 16, 128>}, {pipeline_mode = #tpu.pipeline_mode<synchronous>, transform_indices = @transform_2, window_bounds = array<i64: 1, 128>}, {pipeline_mode = #tpu.pipeline_mode<synchronous>, transform_indices = @transform_3, window_bounds = array<i64: 128, 128>}, {pipeline_mode = #tpu.pipeline_mode<synchronous>, transform_indices = @transform_4, window_bounds = array<i64: 1, 128>}, {pipeline_mode = #tpu.pipeline_mode<synchronous>, transform_indices = @transform_5, window_bounds = array<i64: 128, 128>}, {pipeline_mode = #tpu.pipeline_mode<synchronous>, transform_indices = @transform_6, window_bounds = array<i64: 1, 128>}, {transform_indices = @transform_7, window_bounds = array<i64: 8, 128>}]} {
    %c0 = arith.constant 0 : index
    %c0_0 = arith.constant 0 : index
    %0 = vector.load %arg1[%c0, %c0_0] : memref<8x16xf32, #tpu.memory_space<vmem>>, vector<8x16xf32>
    %c0_1 = arith.constant 0 : index
    %c0_2 = arith.constant 0 : index
    %1 = vector.load %arg2[%c0_1, %c0_2] : memref<16x128xf32, #tpu.memory_space<vmem>>, vector<16x128xf32>
    %cst = arith.constant dense<0.000000e+00> : vector<8x128xf32>
    %2 = tpu.matmul %0, %1, %cst {dimension_numbers = #tpu.dot_dimension_numbers<[1], [0], [0], [1], [0, 0, 1, 1], [], []>} : vector<8x16xf32>, vector<16x128xf32>, vector<8x128xf32> -> vector<8x128xf32>
    %c0_3 = arith.constant 0 : index
    %c0_4 = arith.constant 0 : index
    %3 = vector.load %arg3[%c0_3, %c0_4] : memref<1x128xf32, #tpu.memory_space<vmem>>, vector<1x128xf32>
    %4 = vector.broadcast %3 : vector<1x128xf32> to vector<8x128xf32>
    %5 = arith.addf %2, %4 : vector<8x128xf32>
    %cst_5 = arith.constant 0.000000e+00 : f32
    %6 = vector.broadcast %cst_5 : f32 to vector<8x128xf32>
    %7 = arith.maximumf %5, %6 : vector<8x128xf32>
    %c0_6 = arith.constant 0 : index
    %c0_7 = arith.constant 0 : index
    %8 = vector.load %arg4[%c0_6, %c0_7] : memref<128x128xf32, #tpu.memory_space<vmem>>, vector<128x128xf32>
    %cst_8 = arith.constant dense<0.000000e+00> : vector<8x128xf32>
    %9 = tpu.matmul %7, %8, %cst_8 {dimension_numbers = #tpu.dot_dimension_numbers<[1], [0], [0], [1], [0, 0, 1, 1], [], []>} : vector<8x128xf32>, vector<128x128xf32>, vector<8x128xf32> -> vector<8x128xf32>
    %c0_9 = arith.constant 0 : index
    %c0_10 = arith.constant 0 : index
    %10 = vector.load %arg5[%c0_9, %c0_10] : memref<1x128xf32, #tpu.memory_space<vmem>>, vector<1x128xf32>
    %11 = vector.broadcast %10 : vector<1x128xf32> to vector<8x128xf32>
    %12 = arith.addf %9, %11 : vector<8x128xf32>
    %cst_11 = arith.constant 0.000000e+00 : f32
    %13 = vector.broadcast %cst_11 : f32 to vector<8x128xf32>
    %14 = arith.maximumf %12, %13 : vector<8x128xf32>
    %c0_12 = arith.constant 0 : index
    %c0_13 = arith.constant 0 : index
    %15 = vector.load %arg6[%c0_12, %c0_13] : memref<128x128xf32, #tpu.memory_space<vmem>>, vector<128x128xf32>
    %cst_14 = arith.constant dense<0.000000e+00> : vector<8x128xf32>
    %16 = tpu.matmul %14, %15, %cst_14 {dimension_numbers = #tpu.dot_dimension_numbers<[1], [0], [0], [1], [0, 0, 1, 1], [], []>} : vector<8x128xf32>, vector<128x128xf32>, vector<8x128xf32> -> vector<8x128xf32>
    %c0_15 = arith.constant 0 : index
    %c0_16 = arith.constant 0 : index
    %17 = vector.load %arg7[%c0_15, %c0_16] : memref<1x128xf32, #tpu.memory_space<vmem>>, vector<1x128xf32>
    %18 = vector.broadcast %17 : vector<1x128xf32> to vector<8x128xf32>
    %19 = arith.addf %16, %18 : vector<8x128xf32>
    %20 = math.tanh %19 : vector<8x128xf32>
    %c0_17 = arith.constant 0 : index
    %c0_18 = arith.constant 0 : index
    %21 = vector.load %arg8[%c0_17, %c0_18] : memref<8x128xf32, #tpu.memory_space<vmem>>, vector<8x128xf32>
    tpu.vector_store %arg8[%c0_17, %c0_18], %20 {strides = array<i32>} : memref<8x128xf32, #tpu.memory_space<vmem>>, vector<8x128xf32>,
    return
  }
  func.func @transform_0(%arg0: i32) -> (i32, i32) {
    %c0_i32 = arith.constant 0 : i32
    %c0_i32_0 = arith.constant 0 : i32
    return %arg0, %c0_i32 : i32, i32
  }
  func.func @transform_1(%arg0: i32) -> (i32, i32) {
    %c0_i32 = arith.constant 0 : i32
    %c0_i32_0 = arith.constant 0 : i32
    %c0_i32_1 = arith.constant 0 : i32
    return %c0_i32, %c0_i32_0 : i32, i32
  }
  func.func @transform_2(%arg0: i32) -> (i32, i32) {
    %c0_i32 = arith.constant 0 : i32
    %c0_i32_0 = arith.constant 0 : i32
    %c0_i32_1 = arith.constant 0 : i32
    return %c0_i32, %c0_i32_0 : i32, i32
  }
  func.func @transform_3(%arg0: i32) -> (i32, i32) {
    %c0_i32 = arith.constant 0 : i32
    %c0_i32_0 = arith.constant 0 : i32
    %c0_i32_1 = arith.constant 0 : i32
    return %c0_i32, %c0_i32_0 : i32, i32
  }
  func.func @transform_4(%arg0: i32) -> (i32, i32) {
    %c0_i32 = arith.constant 0 : i32
    %c0_i32_0 = arith.constant 0 : i32
    %c0_i32_1 = arith.constant 0 : i32
    return %c0_i32, %c0_i32_0 : i32, i32
  }
  func.func @transform_5(%arg0: i32) -> (i32, i32) {
    %c0_i32 = arith.constant 0 : i32
    %c0_i32_0 = arith.constant 0 : i32
    %c0_i32_1 = arith.constant 0 : i32
    return %c0_i32, %c0_i32_0 : i32, i32
  }
  func.func @transform_6(%arg0: i32) -> (i32, i32) {
    %c0_i32 = arith.constant 0 : i32
    %c0_i32_0 = arith.constant 0 : i32
    %c0_i32_1 = arith.constant 0 : i32
    return %c0_i32, %c0_i32_0 : i32, i32
  }
  func.func @transform_7(%arg0: i32) -> (i32, i32) {
    %c0_i32 = arith.constant 0 : i32
    %c0_i32_0 = arith.constant 0 : i32
    return %arg0, %c0_i32 : i32, i32
  }
}

</mosaic_0001>

<llo_original>
// kernel: tpu_custom_call.1
$region0: #{tpu_custom_call.1}
  #allocation0 [shape = 'u32[]', space=smem, size = 0x4, offset = 0x4, fixed_abs, tag = 'smem constant byte address 0x4 - core index']
  #allocation1 [shape = 'u32[72,128]{1,0:T(1,128)}', space=vmem, size = 0x9000, scoped, tag = 'internal scratch']
  %s0 = inlined_call_operand.hbm [shape: f32[8,16], index: 0, kind: input, shape index: {}]
  %s1 = inlined_call_operand.hbm [shape: f32[16,128], index: 1, kind: input, shape index: {}]
  %s2 = inlined_call_operand.vmem [shape: f32[1,128], index: 2, kind: input, shape index: {}]
  %s3 = inlined_call_operand.hbm [shape: f32[128,128], index: 3, kind: input, shape index: {}]
  %s4 = inlined_call_operand.vmem [shape: f32[1,128], index: 4, kind: input, shape index: {}]
  %s5 = inlined_call_operand.hbm [shape: f32[128,128], index: 5, kind: input, shape index: {}]
  %s6 = inlined_call_operand.vmem [shape: f32[1,128], index: 6, kind: input, shape index: {}]
  %s7 = inlined_call_operand.hbm [shape: f32[8,128], index: 7, kind: output, shape index: {}]
  %s8 = sld [smem:[#allocation0]]
  $region54: #{tpu_custom_call.1} parent=0
    _
  %s10 = ssub.s32 1, %s8
  %s11 = scalar_select 0, %s10, %s8
  $region1: #{tpu_custom_call.1} parent=0
    #allocation2 [shape = 'u8[4096]{0}', space=vmem, size = 0x1000, scoped, tag = 'input window, operand 0, single buffered']
    #allocation3 [shape = 's32[1]{0}', space=sflag, size = 0x4, scoped, tag = 'scoped memory for tpu_custom_call.1']
    #allocation4 [shape = 's32[1]{0}', space=sflag, size = 0x4, scoped, tag = 'scoped memory for tpu_custom_call.1']
    #allocation5 [shape = 'u8[8192]{0}', space=vmem, size = 0x2000, scoped, tag = 'input window, operand 1, single buffered']
    #allocation6 [shape = 's32[1]{0}', space=sflag, size = 0x4, scoped, tag = 'scoped memory for tpu_custom_call.1']
    #allocation7 [shape = 'u8[65536]{0}', space=vmem, size = 0x10000, scoped, tag = 'input window, operand 3, single buffered']
    #allocation8 [shape = 'u8[65536]{0}', space=vmem, size = 0x10000, scoped, tag = 'input window, operand 5, single buffered']
    #allocation9 [shape = 's32[1]{0}', space=sflag, size = 0x4, scoped, tag = 'scoped memory for tpu_custom_call.1']
    #allocation10 [shape = 'u8[4096]{0}', space=vmem, size = 0x1000, scoped, tag = 'output window, operand 0, single buffered']
    %12 = vsyncpa [#allocation3], 0
    %13 = vsyncpa [#allocation6], 0
    %14 = vsyncpa [#allocation9], 0
    %15 = vsyncpa [#allocation4], 0
    // Predicated region
    $region2: #{tpu_custom_call.1} parent=1 // pred_check
      _
    $region3: #{tpu_custom_call.1} parent=1 // pred_check_branch
      %17 = sbr.rel (0) target = $region5
    $region4: #{tpu_custom_call.1} parent=1 // pred_region
      %19 = vsyncadd [#allocation3], 0
      %s21 = sshll.u32 %s0, 4
      %s22 = int_to_ptr.hbm [resolvable:$true] %s21
      %s23 = sshll.u32 [#allocation2], 4
      %s24 = int_to_ptr.vmem [resolvable:$true] %s23
      %26 = dma.hbm_to_vmem [thread:$0]  %s22, 128, %s24, [#allocation3]
    $region5: #{tpu_custom_call.1} parent=1 // pred_fallthru
      _
    // Predicated region
    $region6: #{tpu_custom_call.1} parent=1 // pred_check
      _
    $region7: #{tpu_custom_call.1} parent=1 // pred_check_branch
      %28 = sbr.rel (0) target = $region9
    $region8: #{tpu_custom_call.1} parent=1 // pred_region
      %30 = vsyncadd [#allocation6], 0
      %s31 = sshll.u32 %s1, 4
      %s32 = int_to_ptr.hbm [resolvable:$true] %s31
      %s33 = sshll.u32 [#allocation5], 4
      %s34 = int_to_ptr.vmem [resolvable:$true] %s33
      %39 = dma.hbm_to_vmem [thread:$0]  %s32, 256, %s34, [#allocation6], 128, 128, 8
    $region9: #{tpu_custom_call.1} parent=1 // pred_fallthru
      _
    // Predicated region
    $region10: #{tpu_custom_call.1} parent=1 // pred_check
      _
    $region11: #{tpu_custom_call.1} parent=1 // pred_check_branch
      %41 = sbr.rel (0) target = $region13
    $region12: #{tpu_custom_call.1} parent=1 // pred_region
      _
    $region13: #{tpu_custom_call.1} parent=1 // pred_fallthru
      _
    // Predicated region
    $region14: #{tpu_custom_call.1} parent=1 // pred_check
      _
    $region15: #{tpu_custom_call.1} parent=1 // pred_check_branch
      %43 = sbr.rel (0) target = $region17
    $region16: #{tpu_custom_call.1} parent=1 // pred_region
      %45 = vsyncadd [#allocation6], 0
      %s46 = sshll.u32 %s3, 4
      %s47 = int_to_ptr.hbm [resolvable:$true] %s46
      %s48 = sshll.u32 [#allocation7], 4
      %s49 = int_to_ptr.vmem [resolvable:$true] %s48
      %54 = dma.hbm_to_vmem [thread:$0]  %s47, 2048, %s49, [#allocation6], 128, 128, 8
    $region17: #{tpu_custom_call.1} parent=1 // pred_fallthru
      _
    // Predicated region
    $region18: #{tpu_custom_call.1} parent=1 // pred_check
      _
    $region19: #{tpu_custom_call.1} parent=1 // pred_check_branch
      %56 = sbr.rel (0) target = $region21
    $region20: #{tpu_custom_call.1} parent=1 // pred_region
      _
    $region21: #{tpu_custom_call.1} parent=1 // pred_fallthru
      _
    // Predicated region
    $region22: #{tpu_custom_call.1} parent=1 // pred_check
      _
    $region23: #{tpu_custom_call.1} parent=1 // pred_check_branch
      %58 = sbr.rel (0) target = $region25
    $region24: #{tpu_custom_call.1} parent=1 // pred_region
      %60 = vsyncadd [#allocation9], 0
      %s61 = sshll.u32 %s5, 4
      %s62 = int_to_ptr.hbm [resolvable:$true] %s61
      %s63 = sshll.u32 [#allocation8], 4
      %s64 = int_to_ptr.vmem [resolvable:$true] %s63
      %69 = dma.hbm_to_vmem [thread:$0]  %s62, 2048, %s64, [#allocation9], 128, 128, 8
    $region25: #{tpu_custom_call.1} parent=1 // pred_fallthru
      _
    // Predicated region
    $region26: #{tpu_custom_call.1} parent=1 // pred_check
      _
    $region27: #{tpu_custom_call.1} parent=1 // pred_check_branch
      %71 = sbr.rel (0) target = $region29
    $region28: #{tpu_custom_call.1} parent=1 // pred_region
      _
    $region29: #{tpu_custom_call.1} parent=1 // pred_fallthru
      _
    // Predicated region
    $region30: #{tpu_custom_call.1} parent=1 // pred_check
      _
    $region31: #{tpu_custom_call.1} parent=1 // pred_check_branch
      %73 = sbr.rel (0) target = $region33
    $region32: #{tpu_custom_call.1} parent=1 // pred_region
      %75 = dma.done [#allocation3], 128
    $region33: #{tpu_custom_call.1} parent=1 // pred_fallthru
      _
    // Predicated region
    $region34: #{tpu_custom_call.1} parent=1 // pred_check
      _
    $region35: #{tpu_custom_call.1} parent=1 // pred_check_branch
      %77 = sbr.rel (0) target = $region37
    $region36: #{tpu_custom_call.1} parent=1 // pred_region
      %79 = dma.done [#allocation6], 256
    $region37: #{tpu_custom_call.1} parent=1 // pred_fallthru
      _
    // Predicated region
    $region38: #{tpu_custom_call.1} parent=1 // pred_check
      _
    $region39: #{tpu_custom_call.1} parent=1 // pred_check_branch
      %81 = sbr.rel (0) target = $region41
    $region40: #{tpu_custom_call.1} parent=1 // pred_region
      %83 = dma.done [#allocation6], 2048
    $region41: #{tpu_custom_call.1} parent=1 // pred_fallthru
      _
    // Predicated region
    $region42: #{tpu_custom_call.1} parent=1 // pred_check
      _
    $region43: #{tpu_custom_call.1} parent=1 // pred_check_branch
      %85 = sbr.rel (0) target = $region45
    $region44: #{tpu_custom_call.1} parent=1 // pred_region
      %87 = dma.done [#allocation9], 2048
    $region45: #{tpu_custom_call.1} parent=1 // pred_fallthru
      _
    %v88 = vld [vmem:[#allocation2] sm:$0xff]
    %v89 = vld [vmem:[#allocation5] sm:$0xff]
    %v90 = vld [vmem:[#allocation5 + $0x8] sm:$0xff]
    %v91 = vld [vmem:[%s2] sm:$0x1]
    %v93 = vperm.slane %v91, 0
    %vm95 = vcmask 130048
    %v97 = vsel %vm95, %v88, 0
    %99 = vmatpush.msra.mxu0 0.0
    %100 = vmatpush.msra.mxu0 0.0
    %101 = vmatpush.msra.mxu0 0.0
    %102 = vmatpush.msra.mxu0 0.0
    %103 = vmatpush.msra.mxu0 0.0
    %104 = vmatpush.msra.mxu0 0.0
    %105 = vmatpush.msra.mxu0 0.0
    %106 = vmatpush.msra.mxu0 0.0
    %107 = vmatpush.msra.mxu0 0.0
    %108 = vmatpush.msra.mxu0 0.0
    %109 = vmatpush.msra.mxu0 0.0
    %110 = vmatpush.msra.mxu0 0.0
    %111 = vmatpush.msra.mxu0 0.0
    %112 = vmatpush.msra.mxu0 0.0
    %113 = vmatpush.msra.mxu0 %v90
    %114 = vmatpush.msra.mxu0 %v89
    %115 = vmatmul.f32.gmra.mxu0 %v97
    %v116 = vpop.f32.mrf.mxu0
    %v117 = vadd.f32 %v93, %v116
    %118 = vdwg.mxu0
    %v119 = vmax.f32 %v117, 0.0
    %v120 = vld [vmem:[#allocation7] sm:$0xff]
    %v121 = vld [vmem:[#allocation7 + $0x8] sm:$0xff]
    %v122 = vld [vmem:[#allocation7 + $0x10] sm:$0xff]
    %v123 = vld [vmem:[#allocation7 + $0x18] sm:$0xff]
    %v124 = vld [vmem:[#allocation7 + $0x20] sm:$0xff]
    %v125 = vld [vmem:[#allocation7 + $0x28] sm:$0xff]
    %v126 = vld [vmem:[#allocation7 + $0x30] sm:$0xff]
    %v127 = vld [vmem:[#allocation7 + $0x38] sm:$0xff]
    %v128 = vld [vmem:[#allocation7 + $0x40] sm:$0xff]
    %v129 = vld [vmem:[#allocation7 + $0x48] sm:$0xff]
    %v130 = vld [vmem:[#allocation7 + $0x50] sm:$0xff]
    %v131 = vld [vmem:[#allocation7 + $0x58] sm:$0xff]
    %v132 = vld [vmem:[#allocation7 + $0x60] sm:$0xff]
    %v133 = vld [vmem:[#allocation7 + $0x68] sm:$0xff]
    %v134 = vld [vmem:[#allocation7 + $0x70] sm:$0xff]
    %v135 = vld [vmem:[#allocation7 + $0x78] sm:$0xff]
    %v136 = vld [vmem:[%s4] sm:$0x1]
    %v138 = vperm.slane %v136, 0
    %140 = vmatpush.msra.mxu0 %v135
    %141 = vmatpush.msra.mxu0 %v134
    %142 = vmatpush.msra.mxu0 %v133
    %143 = vmatpush.msra.mxu0 %v132
    %144 = vmatpush.msra.mxu0 %v131
    %145 = vmatpush.msra.mxu0 %v130
    %146 = vmatpush.msra.mxu0 %v129
    %147 = vmatpush.msra.mxu0 %v128
    %148 = vmatpush.msra.mxu0 %v127
    %149 = vmatpush.msra.mxu0 %v126
    %150 = vmatpush.msra.mxu0 %v125
    %151 = vmatpush.msra.mxu0 %v124
    %152 = vmatpush.msra.mxu0 %v123
    %153 = vmatpush.msra.mxu0 %v122
    %154 = vmatpush.msra.mxu0 %v121
    %155 = vmatpush.msra.mxu0 %v120
    %156 = vmatmul.f32.gmra.mxu0 %v119
    %v157 = vpop.f32.mrf.mxu0
    %v158 = vadd.f32 %v138, %v157
    %159 = vdwg.mxu0
    %v160 = vmax.f32 %v158, 0.0
    %v161 = vld [vmem:[#allocation8] sm:$0xff]
    %v162 = vld [vmem:[#allocation8 + $0x8] sm:$0xff]
    %v163 = vld [vmem:[#allocation8 + $0x10] sm:$0xff]
    %v164 = vld [vmem:[#allocation8 + $0x18] sm:$0xff]
    %v165 = vld [vmem:[#allocation8 + $0x20] sm:$0xff]
    %v166 = vld [vmem:[#allocation8 + $0x28] sm:$0xff]
    %v167 = vld [vmem:[#allocation8 + $0x30] sm:$0xff]
    %v168 = vld [vmem:[#allocation8 + $0x38] sm:$0xff]
    %v169 = vld [vmem:[#allocation8 + $0x40] sm:$0xff]
    %v170 = vld [vmem:[#allocation8 + $0x48] sm:$0xff]
    %v171 = vld [vmem:[#allocation8 + $0x50] sm:$0xff]
    %v172 = vld [vmem:[#allocation8 + $0x58] sm:$0xff]
    %v173 = vld [vmem:[#allocation8 + $0x60] sm:$0xff]
    %v174 = vld [vmem:[#allocation8 + $0x68] sm:$0xff]
    %v175 = vld [vmem:[#allocation8 + $0x70] sm:$0xff]
    %v176 = vld [vmem:[#allocation8 + $0x78] sm:$0xff]
    %v177 = vld [vmem:[%s6] sm:$0x1]
    %v179 = vperm.slane %v177, 0
    %181 = vmatpush.msra.mxu0 %v176
    %182 = vmatpush.msra.mxu0 %v175
    %183 = vmatpush.msra.mxu0 %v174
    %184 = vmatpush.msra.mxu0 %v173
    %185 = vmatpush.msra.mxu0 %v172
    %186 = vmatpush.msra.mxu0 %v171
    %187 = vmatpush.msra.mxu0 %v170
    %188 = vmatpush.msra.mxu0 %v169
    %189 = vmatpush.msra.mxu0 %v168
    %190 = vmatpush.msra.mxu0 %v167
    %191 = vmatpush.msra.mxu0 %v166
    %192 = vmatpush.msra.mxu0 %v165
    %193 = vmatpush.msra.mxu0 %v164
    %194 = vmatpush.msra.mxu0 %v163
    %195 = vmatpush.msra.mxu0 %v162
    %196 = vmatpush.msra.mxu0 %v161
    %197 = vmatmul.f32.gmra.mxu0 %v160
    %v198 = vpop.f32.mrf.mxu0
    %v199 = vadd.f32 %v179, %v198
    %200 = vdwg.mxu0
    %v201 = vtanh.pop %v199
    %202 = vst [vmem:[#allocation10] sm:$0xff] %v201
    // Predicated region
    $region46: #{tpu_custom_call.1} parent=1 // pred_check
      _
    $region47: #{tpu_custom_call.1} parent=1 // pred_check_branch
      %204 = sbr.rel (0) target = $region49
    $region48: #{tpu_custom_call.1} parent=1 // pred_region
      %206 = vsyncadd [#allocation4], 0
      %s208 = sshll.u32 [#allocation10], 4
      %s209 = int_to_ptr.vmem [resolvable:$true] %s208
      %s210 = sshll.u32 %s7, 4
      %s211 = int_to_ptr.hbm [resolvable:$true] %s210
      %213 = dma.vmem_to_hbm [thread:$0]  %s209, 128, %s211, [#allocation4]
    $region49: #{tpu_custom_call.1} parent=1 // pred_fallthru
      _
    // Predicated region
    $region50: #{tpu_custom_call.1} parent=1 // pred_check
      _
    $region51: #{tpu_custom_call.1} parent=1 // pred_check_branch
      %215 = sbr.rel (0) target = $region53
    $region52: #{tpu_custom_call.1} parent=1 // pred_region
      %217 = dma.done [#allocation4], 128
    $region53: #{tpu_custom_call.1} parent=1 // pred_fallthru
      _
    %218 = vsyncpa [#allocation3], 1
    %219 = vsyncpa [#allocation6], 1
    %220 = vsyncpa [#allocation9], 1
    %221 = vsyncpa [#allocation4], 1

</llo_original>
